<compile_context>
chip_gen: v5e
topology: v5e:2x2
jax: 0.10.0
libtpu: 0.0.40
codegen_flags: <defaults>
</compile_context>

<pallas_src>
import jax
import jax.numpy as jnp
from jax.experimental import pallas as pl
from jax.experimental.pallas import tpu as pltpu


def _copy_kernel(x_ref, o_ref):
    # Whole-tile load + store (lane-dense elementwise passthrough).
    o_ref[...] = x_ref[...]


def _identity_copy_2d(x2d: jax.Array) -> jax.Array:
    """Identity copy of a (rows, features) array with lane-dense tiling."""
    n, f = x2d.shape
    itemsize = jnp.dtype(x2d.dtype).itemsize

    # Pick the row-tile so each block is ~2 MiB (well under the scoped VMEM
    # budget even with double-buffered in+out buffers).
    target_bytes = 2 * 1024 * 1024
    rows_per_tile = max(1, target_bytes // max(1, f * itemsize))
    if rows_per_tile >= n:
        tm = n                                   # single grid step: whole array
    else:
        tm = max(8, (rows_per_tile // 8) * 8)    # keep sublane dim multiple of 8

    grid = (pl.cdiv(n, tm),)

    return pl.pallas_call(
        _copy_kernel,
        out_shape=jax.ShapeDtypeStruct((n, f), x2d.dtype),
        grid_spec=pltpu.PrefetchScalarGridSpec(
            num_scalar_prefetch=0,
            grid=grid,
            in_specs=[pl.BlockSpec((tm, f), lambda i: (i, 0))],
            out_specs=pl.BlockSpec((tm, f), lambda i: (i, 0)),
        ),
        # Identity path: alias output onto the input buffer -> no extra HBM
        # round trip allocated for the result.
        input_output_aliases={0: 0},
        compiler_params=pltpu.CompilerParams(
            dimension_semantics=("parallel",),
        ),
    )(x2d)


@jax.jit
def model_forward(x: jax.Array) -> jax.Array:
    """Pallas equivalent of Model.forward (identity passthrough, see TODO)."""
    n = x.shape[0]
    flat = x.reshape(n, -1)   # lane-dense: last dim = C*H*W (multiple of 128 here)
    out = _identity_copy_2d(flat)
    return out.reshape(x.shape)


class PallasModel:
    """Minimal JAX-side mirror of the PyTorch Model base class."""

    def __init__(self, filepath=None):
        self.filepath = filepath or "default_model.pt"
        self.trainer_config = ""
        # No parameters declared in the PyTorch __init__, so none here either.

    def __call__(self, x):
        return model_forward(x)


if __name__ == "__main__":
    key = jax.random.PRNGKey(0)
    # Small NCHW input consistent with a conv-style CVAE frontend.
    x = jax.random.normal(key, (2, 4, 16, 16), dtype=jnp.float32)

    model = PallasModel()
    out = model(x)
    out = jax.block_until_ready(out)

    assert out.shape == x.shape and out.dtype == x.dtype
    assert bool(jnp.allclose(out, x)), "identity passthrough mismatch"
    print("KERNEL_OK")
</pallas_src>

<mosaic_0001>
module attributes {stable_mosaic.version = 11 : i64} {
  func.func @_copy_kernel(%arg0: i32, %arg1: memref<2x1024xf32, #tpu.memory_space<vmem>>, %arg2: memref<2x1024xf32, #tpu.memory_space<vmem>>) attributes {dimension_semantics = [#tpu.dimension_semantics<parallel>], iteration_bounds = array<i64: 1>, scalar_prefetch = 0 : i64, scratch_operands = 0 : i64, tpu.core_type = #tpu.core_type<tc>, window_params = [{transform_indices = @transform_0, window_bounds = array<i64: 2, 1024>}, {transform_indices = @transform_1, window_bounds = array<i64: 2, 1024>}]} {
    %c0 = arith.constant 0 : index
    %c0_0 = arith.constant 0 : index
    %0 = vector.load %arg1[%c0, %c0_0] : memref<2x1024xf32, #tpu.memory_space<vmem>>, vector<2x1024xf32>
    %c0_1 = arith.constant 0 : index
    %c0_2 = arith.constant 0 : index
    %1 = vector.load %arg2[%c0_1, %c0_2] : memref<2x1024xf32, #tpu.memory_space<vmem>>, vector<2x1024xf32>
    tpu.vector_store %arg2[%c0_1, %c0_2], %0 {strides = array<i32>} : memref<2x1024xf32, #tpu.memory_space<vmem>>, vector<2x1024xf32>,
    return
  }
  func.func @transform_0(%arg0: i32) -> (i32, i32) {
    %c0_i32 = arith.constant 0 : i32
    %c0_i32_0 = arith.constant 0 : i32
    return %arg0, %c0_i32 : i32, i32
  }
  func.func @transform_1(%arg0: i32) -> (i32, i32) {
    %c0_i32 = arith.constant 0 : i32
    %c0_i32_0 = arith.constant 0 : i32
    return %arg0, %c0_i32 : i32, i32
  }
}

</mosaic_0001>

<llo_original>
// kernel: model_forward.1
$region0: #{model_forward.1}
  #allocation0 [shape = 'u32[]', space=smem, size = 0x4, offset = 0x4, fixed_abs, tag = 'smem constant byte address 0x4 - core index']
  #allocation1 [shape = 'u32[72,128]{1,0:T(1,128)}', space=vmem, size = 0x9000, scoped, tag = 'internal scratch']
  %s0 = inlined_call_operand.vmem [shape: f32[2,1024], index: 0, kind: input, shape index: {}, may-alias: {0,1}]
  %s1 = inlined_call_operand.vmem [shape: f32[2,1024], index: 1, kind: output, shape index: {}, may-alias: {0,1}]
  %s2 = sld [smem:[#allocation0]]
  $region14: #{model_forward.1} parent=0
    _
  %s4 = ssub.s32 1, %s2
  %s5 = scalar_select 0, %s4, %s2
  // Predicated region
  $region2: #{model_forward.1} parent=0 // pred_check
    _
  $region3: #{model_forward.1} parent=0 // pred_check_branch
    %7 = sbr.rel (0) target = $region5
  $region4: #{model_forward.1} parent=0 // pred_region
    _
  $region5: #{model_forward.1} parent=0 // pred_fallthru
    _
  %v8 = vld [vmem:[%s0] sm:$0xff]
  %v9 = vld [vmem:[%s0 + $0x8] sm:$0xff]
  %10 = vst [vmem:[%s1] sm:$0xff] %v8
  %11 = vst [vmem:[%s1 + $0x8] sm:$0xff] %v9
  // Predicated region
  $region6: #{model_forward.1} parent=0 // pred_check
    _
  $region7: #{model_forward.1} parent=0 // pred_check_branch
    %13 = sbr.rel (0) target = $region9
  $region8: #{model_forward.1} parent=0 // pred_region
    _
  $region9: #{model_forward.1} parent=0 // pred_fallthru
    _
  // Predicated region
  $region10: #{model_forward.1} parent=0 // pred_check
    _
  $region11: #{model_forward.1} parent=0 // pred_check_branch
    %15 = sbr.rel (0) target = $region13
  $region12: #{model_forward.1} parent=0 // pred_region
    _
  $region13: #{model_forward.1} parent=0 // pred_fallthru
    _

</llo_original>
